<compile_context>
chip_gen: v5e
topology: v5e:2x2
jax: 0.10.0
libtpu: 0.0.40
codegen_flags: <defaults>
</compile_context>

<pallas_src>
import math

import jax
import jax.numpy as jnp
from jax.experimental import pallas as pl
from jax.experimental.pallas import tpu as pltpu

# Constants matching the PyTorch module.
PI = 1.0
SIGMA_1 = math.exp(-0.1)
SIGMA_2 = math.exp(-0.1)
LOG_SQRT_2PI = math.log(math.sqrt(2.0 * math.pi))

# The closed-form prior below is valid because the mixture collapses to one
# Gaussian (PI == 1 and SIGMA_1 == SIGMA_2).  Use logaddexp if this changes.
assert PI == 1.0 and SIGMA_1 == SIGMA_2

_PRIOR_CONST = -LOG_SQRT_2PI - math.log(SIGMA_1)
_PRIOR_INV_2VAR = 1.0 / (2.0 * SIGMA_1 * SIGMA_1)

# A zero-padded parameter slot has mu=0, rho=0, eps=0 -> sigma=softplus(0)=ln 2,
# w=0.  Its contribution to each log-prob is therefore a known constant, which
# the wrapper subtracts from the kernel's unmasked partial sums.
_PAD_LVP = -LOG_SQRT_2PI - math.log(math.log(2.0))   # log q per padded entry
_PAD_LP = _PRIOR_CONST                                # log p per padded entry


def _stable_softplus(x):
    # log1p(exp(x)) without exp overflow for large positive x.
    return jnp.maximum(x, 0.0) + jnp.log1p(jnp.exp(-jnp.abs(x)))


def _pad_cols(a, out_p):
    pad = out_p - a.shape[-1]
    if pad == 0:
        return a
    return jnp.pad(a, ((0, 0), (0, pad)))


def _vmem_capacity_bytes():
    try:
        return int(pltpu.get_tpu_info().vmem_capacity_bytes)
    except Exception:
        return 128 * 1024 * 1024   # v5e/v6e default; interpret mode ignores it


def _snap_tile(req, out_p):
    """Largest multiple of 128 <= req that divides the padded Out extent."""
    req = max(128, min(int(req), out_p))
    req = (req // 128) * 128
    while out_p % req != 0:
        req -= 128
    return req


def _make_kernel(*, do_sample, do_logprobs, use_bf16):
    """Kernel variant specialized on the static forward flags."""
    need_rho = do_sample or do_logprobs

    def kernel(*refs):
        it = iter(refs)
        x_ref = next(it)                                # (B, In)
        wmu_ref = next(it)                              # (In, T)
        wrho_ref = next(it) if need_rho else None       # (In, T)
        weps_ref = next(it) if do_sample else None      # (In, T)
        bmu_ref = next(it)                              # (1, T)
        brho_ref = next(it) if need_rho else None       # (1, T)
        beps_ref = next(it) if do_sample else None      # (1, T)
        out_ref = next(it)                              # (B, T)
        part_ref = next(it) if do_logprobs else None    # (1, 1, 2) per-tile partials

        x = x_ref[...]
        wmu = wmu_ref[...]
        bmu = bmu_ref[...]

        if need_rho:
            wsig = _stable_softplus(wrho_ref[...])
            bsig = _stable_softplus(brho_ref[...])

        if do_sample:
            weps = weps_ref[...]
            beps = beps_ref[...]
            w = wmu + wsig * weps
            b = bmu + bsig * beps
        else:
            w = wmu
            b = bmu

        # Hot path: plain NN contraction on the MXU, lane-dense output store.
        if use_bf16:
            acc = jnp.dot(x.astype(jnp.bfloat16), w.astype(jnp.bfloat16),
                          preferred_element_type=jnp.float32)
        else:
            acc = jnp.dot(x, w, preferred_element_type=jnp.float32)
        out_ref[...] = (acc + b).astype(out_ref.dtype)

        if do_logprobs:
            # Unmasked per-tile partials; padded columns contribute known
            # constants which the wrapper subtracts analytically.
            # log q(theta): with w = mu + sigma*eps, (w-mu)^2/(2 sigma^2) = eps^2/2.
            lvp_w = -LOG_SQRT_2PI - jnp.log(wsig)
            lvp_b = -LOG_SQRT_2PI - jnp.log(bsig)
            if do_sample:
                lvp_w = lvp_w - 0.5 * (weps * weps)
                lvp_b = lvp_b - 0.5 * (beps * beps)
            lvp = jnp.sum(lvp_w) + jnp.sum(lvp_b)

            # log p(theta): PI == 1, SIGMA_1 == SIGMA_2 -> single Gaussian.
            lp_w = _PRIOR_CONST - _PRIOR_INV_2VAR * (w * w)
            lp_b = _PRIOR_CONST - _PRIOR_INV_2VAR * (b * b)
            lprior = jnp.sum(lp_w) + jnp.sum(lp_b)

            sel = jax.lax.broadcasted_iota(jnp.int32, (1, 1, 2), 2)
            part_ref[...] = jnp.where(sel == 0, lvp, lprior)

    return kernel


def prepare_params(weight_mu, weight_rho, bias_mu, bias_rho):
    """One-time layout work: (Out, In) -> (In, Out_p) with Out padded to a
    lane-dense multiple of 128.  Do this at init, not per forward call."""
    weight_mu = jnp.asarray(weight_mu, jnp.float32)
    Out, In = weight_mu.shape
    out_p = int(pl.cdiv(Out, 128) * 128)
    return {
        "wmu_t": _pad_cols(weight_mu.T, out_p),
        "wrho_t": _pad_cols(jnp.asarray(weight_rho, jnp.float32).T, out_p),
        "bmu_p": _pad_cols(jnp.asarray(bias_mu, jnp.float32).reshape(1, Out), out_p),
        "brho_p": _pad_cols(jnp.asarray(bias_rho, jnp.float32).reshape(1, Out), out_p),
        "in_features": In,
        "out_features": Out,
        "out_p": out_p,
    }


def bayesian_linear_forward(x, params, *, seed=0, training=True, sample=False,
                            calculate_log_probs=False, tile_out=None,
                            use_bf16=None):
    """Mirrors BayesianLinearLast.forward.

    Returns (out, log_prior, log_variational_posterior)."""
    x = jnp.asarray(x, jnp.float32)
    B, In = x.shape
    assert In == params["in_features"]
    Out = params["out_features"]
    out_p = params["out_p"]

    do_sample = bool(training or sample)
    do_logprobs = bool(training or calculate_log_probs)
    need_rho = do_sample or do_logprobs
    if use_bf16 is None:
        use_bf16 = B >= 128   # bf16 MXU operands only matter for big batches

    # ---- generation-aware tile selection (fits v7x 64 MiB and v5e/v6e 128 MiB) ----
    vmem_cap = _vmem_capacity_bytes()
    budget = vmem_cap // 4

    def vmem_estimate(t):
        f32 = 4
        n_wide = 1 + (1 if need_rho else 0) + (1 if do_sample else 0)
        per_tile_in = n_wide * (In * t + t)
        outs = B * t
        if do_logprobs:
            temps = 8 * In * t       # wsig, weps, w, lvp_w, lp_w, w*w, ... live together
        elif do_sample:
            temps = 4 * In * t
        else:
            temps = 2 * In * t
        return (2 * (per_tile_in + B * In + outs) + temps) * f32  # x2 double buffering

    if tile_out is not None:
        t = _snap_tile(tile_out, out_p)
    else:
        # Eval/serving is HBM-bound -> big DMAs; training/logprob keeps temporaries small.
        cands = (256, 128) if (do_logprobs or do_sample) else (2048, 1024, 512, 256, 128)
        t = 128
        for cand in cands:
            cand = min(cand, out_p)
            if out_p % cand:
                continue
            if vmem_estimate(cand) <= budget:
                t = cand
                break
    n_tiles = out_p // t
    est = vmem_estimate(t)
    vmem_limit = int(min(max(est * 3 // 2 + (4 << 20), 16 << 20),
                         max(vmem_cap - (16 << 20), 24 << 20)))

    # ---- eps (zero-padded so padded columns contribute known constants) ----
    if do_sample:
        kw, kb = jax.random.split(jax.random.PRNGKey(int(seed)))
        weps = _pad_cols(jax.random.normal(kw, (In, Out), jnp.float32), out_p)
        beps = _pad_cols(jax.random.normal(kb, (1, Out), jnp.float32), out_p)

    # TODO(synk): for very large B, add a second "parallel" grid axis over the
    # batch (tile x as (TB, In), out as (TB, t)) to bound the VMEM working set.
    args, in_specs = [x], [pl.BlockSpec((B, In), lambda i: (0, 0))]
    args.append(params["wmu_t"])
    in_specs.append(pl.BlockSpec((In, t), lambda i: (0, i)))
    if need_rho:
        args.append(params["wrho_t"])
        in_specs.append(pl.BlockSpec((In, t), lambda i: (0, i)))
    if do_sample:
        args.append(weps)
        in_specs.append(pl.BlockSpec((In, t), lambda i: (0, i)))
    args.append(params["bmu_p"])
    in_specs.append(pl.BlockSpec((1, t), lambda i: (0, i)))
    if need_rho:
        args.append(params["brho_p"])
        in_specs.append(pl.BlockSpec((1, t), lambda i: (0, i)))
    if do_sample:
        args.append(beps)
        in_specs.append(pl.BlockSpec((1, t), lambda i: (0, i)))

    out_shapes = [jax.ShapeDtypeStruct((B, out_p), jnp.float32)]
    out_specs = [pl.BlockSpec((B, t), lambda i: (0, i))]
    if do_logprobs:
        # Per-tile partials -> the Out-tile axis stays fully parallel.
        out_shapes.append(jax.ShapeDtypeStruct((n_tiles, 1, 2), jnp.float32))
        out_specs.append(pl.BlockSpec((1, 1, 2), lambda i: (i, 0, 0)))

    kernel = _make_kernel(do_sample=do_sample, do_logprobs=do_logprobs,
                          use_bf16=bool(use_bf16))

    results = pl.pallas_call(
        kernel,
        grid=(n_tiles,),
        in_specs=in_specs,
        out_specs=tuple(out_specs) if do_logprobs else out_specs[0],
        out_shape=tuple(out_shapes) if do_logprobs else out_shapes[0],
        compiler_params=pltpu.CompilerParams(
            dimension_semantics=("parallel",), vmem_limit_bytes=vmem_limit),
    )(*args)

    if do_logprobs:
        out_padded, parts = results
        sums = jnp.sum(parts, axis=(0, 1))            # (2,): [lvp, lprior]
        n_pad_el = (out_p - Out) * (In + 1)           # padded weight + bias entries
        log_var_post = sums[0] - jnp.float32(n_pad_el * _PAD_LVP)
        log_prior = sums[1] - jnp.float32(n_pad_el * _PAD_LP)
    else:
        out_padded = results
        log_prior = jnp.float32(0.0)
        log_var_post = jnp.float32(0.0)

    return out_padded[:, :Out], log_prior, log_var_post


if __name__ == "__main__":
    # Small shapes consistent with a final linear layer: batch=8, in=32, out=16.
    B, IN_F, OUT_F = 8, 32, 16

    root = jax.random.PRNGKey(0)
    k_x, k_wmu, k_wrho, k_bmu, k_brho = jax.random.split(root, 5)

    x = jax.random.normal(k_x, (B, IN_F), dtype=jnp.float32)
    weight_mu = jax.random.uniform(
        k_wmu, (OUT_F, IN_F), minval=-0.2, maxval=0.2, dtype=jnp.float32)
    weight_rho = jax.random.uniform(
        k_wrho, (OUT_F, IN_F), minval=-5.0, maxval=-4.0, dtype=jnp.float32)
    bias_mu = jax.random.uniform(
        k_bmu, (OUT_F,), minval=-0.2, maxval=0.2, dtype=jnp.float32)
    bias_rho = jax.random.uniform(
        k_brho, (OUT_F,), minval=-5.0, maxval=-4.0, dtype=jnp.float32)

    params = prepare_params(weight_mu, weight_rho, bias_mu, bias_rho)

    wsig = jnp.log1p(jnp.exp(weight_rho))
    bsig = jnp.log1p(jnp.exp(bias_rho))
    hp = jax.lax.Precision.HIGHEST
    out_mean_ref = jnp.dot(x, weight_mu.T, precision=hp) + bias_mu

    ATOL, RTOL = 2e-3, 2e-3
    L_ATOL, L_RTOL = 0.5, 1e-3

    # 1) eval / serving path: W = mu, no sampling, no log-probs.
    out_eval, lp_e, lvp_e = bayesian_linear_forward(
        x, params, seed=0, training=False, sample=False, calculate_log_probs=False)
    jax.block_until_ready(out_eval)
    assert out_eval.shape == (B, OUT_F)
    assert jnp.allclose(out_eval, out_mean_ref, atol=ATOL, rtol=RTOL)
    assert float(lp_e) == 0.0 and float(lvp_e) == 0.0

    # 2) eval + calculate_log_probs: deterministic (W = mu) => closed-form reference.
    out_lp, lp_d, lvp_d = bayesian_linear_forward(
        x, params, seed=0, training=False, sample=False, calculate_log_probs=True)
    jax.block_until_ready((out_lp, lp_d, lvp_d))
    lvp_det_ref = (jnp.sum(-LOG_SQRT_2PI - jnp.log(wsig))
                   + jnp.sum(-LOG_SQRT_2PI - jnp.log(bsig)))
    lp_det_ref = (jnp.sum(_PRIOR_CONST - _PRIOR_INV_2VAR * weight_mu ** 2)
                  + jnp.sum(_PRIOR_CONST - _PRIOR_INV_2VAR * bias_mu ** 2))
    assert jnp.allclose(out_lp, out_mean_ref, atol=ATOL, rtol=RTOL)
    assert jnp.allclose(lvp_d, lvp_det_ref, atol=L_ATOL, rtol=L_RTOL)
    assert jnp.allclose(lp_d, lp_det_ref, atol=L_ATOL, rtol=L_RTOL)

    # 3) training path: sampled W/b + log-probs; eps is reproducible -> exact reference.
    seed = 1234
    out_tr, lp_t, lvp_t = bayesian_linear_forward(x, params, seed=seed, training=True)
    jax.block_until_ready((out_tr, lp_t, lvp_t))
    kw, kb = jax.random.split(jax.random.PRNGKey(seed))
    eps_w = jax.random.normal(kw, (IN_F, OUT_F), jnp.float32)   # (In, Out) layout
    eps_b = jax.random.normal(kb, (1, OUT_F), jnp.float32)
    w_s = weight_mu.T + wsig.T * eps_w
    b_s = bias_mu + bsig * eps_b[0]
    out_tr_ref = jnp.dot(x, w_s, precision=hp) + b_s
    lvp_ref = (jnp.sum(-LOG_SQRT_2PI - jnp.log(wsig.T) - 0.5 * eps_w ** 2)
               + jnp.sum(-LOG_SQRT_2PI - jnp.log(bsig) - 0.5 * eps_b[0] ** 2))
    lp_ref = (jnp.sum(_PRIOR_CONST - _PRIOR_INV_2VAR * w_s ** 2)
              + jnp.sum(_PRIOR_CONST - _PRIOR_INV_2VAR * b_s ** 2))
    assert jnp.allclose(out_tr, out_tr_ref, atol=ATOL, rtol=RTOL)
    assert jnp.allclose(lvp_t, lvp_ref, atol=L_ATOL, rtol=L_RTOL)
    assert jnp.allclose(lp_t, lp_ref, atol=L_ATOL, rtol=L_RTOL)

    # 4) multi-tile grid (Out=160 -> 2 lane-dense tiles of 128) + padding correction.
    B2, IN2, OUT2 = 16, 64, 160
    k2 = jax.random.split(jax.random.PRNGKey(7), 5)
    x2 = jax.random.normal(k2[0], (B2, IN2), dtype=jnp.float32)
    wmu2 = jax.random.uniform(k2[1], (OUT2, IN2), minval=-0.2, maxval=0.2, dtype=jnp.float32)
    wrho2 = jax.random.uniform(k2[2], (OUT2, IN2), minval=-5.0, maxval=-4.0, dtype=jnp.float32)
    bmu2 = jax.random.uniform(k2[3], (OUT2,), minval=-0.2, maxval=0.2, dtype=jnp.float32)
    brho2 = jax.random.uniform(k2[4], (OUT2,), minval=-5.0, maxval=-4.0, dtype=jnp.float32)
    params2 = prepare_params(wmu2, wrho2, bmu2, brho2)
    wsig2 = jnp.log1p(jnp.exp(wrho2))
    bsig2 = jnp.log1p(jnp.exp(brho2))

    out4, lp4, lvp4 = bayesian_linear_forward(
        x2, params2, seed=0, training=False, sample=False,
        calculate_log_probs=True, tile_out=128)
    jax.block_until_ready((out4, lp4, lvp4))
    out4_ref = jnp.dot(x2, wmu2.T, precision=hp) + bmu2
    lvp4_ref = (jnp.sum(-LOG_SQRT_2PI - jnp.log(wsig2))
                + jnp.sum(-LOG_SQRT_2PI - jnp.log(bsig2)))
    lp4_ref = (jnp.sum(_PRIOR_CONST - _PRIOR_INV_2VAR * wmu2 ** 2)
               + jnp.sum(_PRIOR_CONST - _PRIOR_INV_2VAR * bmu2 ** 2))
    assert out4.shape == (B2, OUT2)
    assert jnp.allclose(out4, out4_ref, atol=ATOL, rtol=RTOL)
    assert jnp.allclose(lvp4, lvp4_ref, atol=L_ATOL, rtol=L_RTOL)
    assert jnp.allclose(lp4, lp4_ref, atol=L_ATOL, rtol=L_RTOL)

    # 5) training on the multi-tile shapes (sampled path with padded columns).
    out5, lp5, lvp5 = bayesian_linear_forward(
        x2, params2, seed=99, training=True, tile_out=128)
    jax.block_until_ready((out5, lp5, lvp5))
    kw5, kb5 = jax.random.split(jax.random.PRNGKey(99))
    eps_w5 = jax.random.normal(kw5, (IN2, OUT2), jnp.float32)
    eps_b5 = jax.random.normal(kb5, (1, OUT2), jnp.float32)
    w5 = wmu2.T + wsig2.T * eps_w5
    b5 = bmu2 + bsig2 * eps_b5[0]
    out5_ref = jnp.dot(x2, w5, precision=hp) + b5
    lvp5_ref = (jnp.sum(-LOG_SQRT_2PI - jnp.log(wsig2.T) - 0.5 * eps_w5 ** 2)
                + jnp.sum(-LOG_SQRT_2PI - jnp.log(bsig2) - 0.5 * eps_b5[0] ** 2))
    lp5_ref = (jnp.sum(_PRIOR_CONST - _PRIOR_INV_2VAR * w5 ** 2)
               + jnp.sum(_PRIOR_CONST - _PRIOR_INV_2VAR * b5 ** 2))
    assert jnp.allclose(out5, out5_ref, atol=ATOL, rtol=RTOL)
    assert jnp.allclose(lvp5, lvp5_ref, atol=L_ATOL, rtol=L_RTOL)
    assert jnp.allclose(lp5, lp5_ref, atol=L_ATOL, rtol=L_RTOL)

    print("KERNEL_OK")
</pallas_src>

<mosaic_0001>
module attributes {stable_mosaic.version = 11 : i64} {
  func.func @kernel(%arg0: i32, %arg1: memref<8x32xf32, #tpu.memory_space<vmem>>, %arg2: memref<32x128xf32, #tpu.memory_space<vmem>>, %arg3: memref<1x128xf32, #tpu.memory_space<vmem>>, %arg4: memref<8x128xf32, #tpu.memory_space<vmem>>) attributes {dimension_semantics = [#tpu.dimension_semantics<parallel>], iteration_bounds = array<i64: 1>, scalar_prefetch = 0 : i64, scratch_operands = 0 : i64, tpu.core_type = #tpu.core_type<tc>, window_params = [{pipeline_mode = #tpu.pipeline_mode<synchronous>, transform_indices = @transform_0, window_bounds = array<i64: 8, 32>}, {transform_indices = @transform_1, window_bounds = array<i64: 32, 128>}, {transform_indices = @transform_2, window_bounds = array<i64: 1, 128>}, {transform_indices = @transform_3, window_bounds = array<i64: 8, 128>}]} {
    %c0 = arith.constant 0 : index
    %c0_0 = arith.constant 0 : index
    %0 = vector.load %arg1[%c0, %c0_0] : memref<8x32xf32, #tpu.memory_space<vmem>>, vector<8x32xf32>
    %c0_1 = arith.constant 0 : index
    %c0_2 = arith.constant 0 : index
    %1 = vector.load %arg2[%c0_1, %c0_2] : memref<32x128xf32, #tpu.memory_space<vmem>>, vector<32x128xf32>
    %c0_3 = arith.constant 0 : index
    %c0_4 = arith.constant 0 : index
    %2 = vector.load %arg3[%c0_3, %c0_4] : memref<1x128xf32, #tpu.memory_space<vmem>>, vector<1x128xf32>
    %cst = arith.constant dense<0.000000e+00> : vector<8x128xf32>
    %3 = tpu.matmul %0, %1, %cst {dimension_numbers = #tpu.dot_dimension_numbers<[1], [0], [0], [1], [0, 0, 1, 1], [], []>} : vector<8x32xf32>, vector<32x128xf32>, vector<8x128xf32> -> vector<8x128xf32>
    %4 = vector.broadcast %2 : vector<1x128xf32> to vector<8x128xf32>
    %5 = arith.addf %3, %4 : vector<8x128xf32>
    %c0_5 = arith.constant 0 : index
    %c0_6 = arith.constant 0 : index
    %6 = vector.load %arg4[%c0_5, %c0_6] : memref<8x128xf32, #tpu.memory_space<vmem>>, vector<8x128xf32>
    tpu.vector_store %arg4[%c0_5, %c0_6], %5 {strides = array<i32>} : memref<8x128xf32, #tpu.memory_space<vmem>>, vector<8x128xf32>,
    return
  }
  func.func @transform_0(%arg0: i32) -> (i32, i32) {
    %c0_i32 = arith.constant 0 : i32
    %c0_i32_0 = arith.constant 0 : i32
    %c0_i32_1 = arith.constant 0 : i32
    return %c0_i32, %c0_i32_0 : i32, i32
  }
  func.func @transform_1(%arg0: i32) -> (i32, i32) {
    %c0_i32 = arith.constant 0 : i32
    %c0_i32_0 = arith.constant 0 : i32
    return %c0_i32, %arg0 : i32, i32
  }
  func.func @transform_2(%arg0: i32) -> (i32, i32) {
    %c0_i32 = arith.constant 0 : i32
    %c0_i32_0 = arith.constant 0 : i32
    return %c0_i32, %arg0 : i32, i32
  }
  func.func @transform_3(%arg0: i32) -> (i32, i32) {
    %c0_i32 = arith.constant 0 : i32
    %c0_i32_0 = arith.constant 0 : i32
    return %c0_i32, %arg0 : i32, i32
  }
}

</mosaic_0001>

<llo_original>
// kernel: tpu_custom_call.1
$region0: #{tpu_custom_call.1}
  #allocation0 [shape = 'u32[]', space=smem, size = 0x4, offset = 0x4, fixed_abs, tag = 'smem constant byte address 0x4 - core index']
  #allocation1 [shape = 'u32[72,128]{1,0:T(1,128)}', space=vmem, size = 0x9000, scoped, tag = 'internal scratch']
  %s0 = inlined_call_operand.hbm [shape: f32[8,32], index: 0, kind: input, shape index: {}]
  %s1 = inlined_call_operand.hbm [shape: f32[32,128], index: 1, kind: input, shape index: {}]
  %s2 = inlined_call_operand.vmem [shape: f32[1,128], index: 2, kind: input, shape index: {}]
  %s3 = inlined_call_operand.hbm [shape: f32[8,128], index: 3, kind: output, shape index: {}]
  %s4 = sld [smem:[#allocation0]]
  $region30: #{tpu_custom_call.1} parent=0
    _
  %s6 = ssub.s32 1, %s4
  %s7 = scalar_select 0, %s6, %s4
  $region1: #{tpu_custom_call.1} parent=0
    #allocation2 [shape = 'u8[4096]{0}', space=vmem, size = 0x1000, scoped, tag = 'input window, operand 0, single buffered']
    #allocation3 [shape = 's32[1]{0}', space=sflag, size = 0x4, scoped, tag = 'scoped memory for tpu_custom_call.1']
    #allocation4 [shape = 's32[1]{0}', space=sflag, size = 0x4, scoped, tag = 'scoped memory for tpu_custom_call.1']
    #allocation5 [shape = 'u8[16384]{0}', space=vmem, size = 0x4000, scoped, tag = 'input window, operand 1, single buffered']
    #allocation6 [shape = 's32[1]{0}', space=sflag, size = 0x4, scoped, tag = 'scoped memory for tpu_custom_call.1']
    #allocation7 [shape = 'u8[4096]{0}', space=vmem, size = 0x1000, scoped, tag = 'output window, operand 0, single buffered']
    %8 = vsyncpa [#allocation3], 0
    %9 = vsyncpa [#allocation6], 0
    %10 = vsyncpa [#allocation4], 0
    // Predicated region
    $region2: #{tpu_custom_call.1} parent=1 // pred_check
      _
    $region3: #{tpu_custom_call.1} parent=1 // pred_check_branch
      %12 = sbr.rel (0) target = $region5
    $region4: #{tpu_custom_call.1} parent=1 // pred_region
      %14 = vsyncadd [#allocation3], 0
      %s16 = sshll.u32 %s0, 4
      %s17 = int_to_ptr.hbm [resolvable:$true] %s16
      %s18 = sshll.u32 [#allocation2], 4
      %s19 = int_to_ptr.vmem [resolvable:$true] %s18
      %21 = dma.hbm_to_vmem [thread:$0]  %s17, 128, %s19, [#allocation3]
    $region5: #{tpu_custom_call.1} parent=1 // pred_fallthru
      _
    // Predicated region
    $region6: #{tpu_custom_call.1} parent=1 // pred_check
      _
    $region7: #{tpu_custom_call.1} parent=1 // pred_check_branch
      %23 = sbr.rel (0) target = $region9
    $region8: #{tpu_custom_call.1} parent=1 // pred_region
      %25 = vsyncadd [#allocation6], 0
      %s26 = sshll.u32 %s1, 4
      %s27 = int_to_ptr.hbm [resolvable:$true] %s26
      %s28 = sshll.u32 [#allocation5], 4
      %s29 = int_to_ptr.vmem [resolvable:$true] %s28
      %34 = dma.hbm_to_vmem [thread:$0]  %s27, 512, %s29, [#allocation6], 128, 128, 8
    $region9: #{tpu_custom_call.1} parent=1 // pred_fallthru
      _
    // Predicated region
    $region10: #{tpu_custom_call.1} parent=1 // pred_check
      _
    $region11: #{tpu_custom_call.1} parent=1 // pred_check_branch
      %36 = sbr.rel (0) target = $region13
    $region12: #{tpu_custom_call.1} parent=1 // pred_region
      _
    $region13: #{tpu_custom_call.1} parent=1 // pred_fallthru
      _
    // Predicated region
    $region14: #{tpu_custom_call.1} parent=1 // pred_check
      _
    $region15: #{tpu_custom_call.1} parent=1 // pred_check_branch
      %38 = sbr.rel (0) target = $region17
    $region16: #{tpu_custom_call.1} parent=1 // pred_region
      %40 = dma.done [#allocation3], 128
    $region17: #{tpu_custom_call.1} parent=1 // pred_fallthru
      _
    // Predicated region
    $region18: #{tpu_custom_call.1} parent=1 // pred_check
      _
    $region19: #{tpu_custom_call.1} parent=1 // pred_check_branch
      %42 = sbr.rel (0) target = $region21
    $region20: #{tpu_custom_call.1} parent=1 // pred_region
      %44 = dma.done [#allocation6], 512
    $region21: #{tpu_custom_call.1} parent=1 // pred_fallthru
      _
    %v45 = vld [vmem:[#allocation2] sm:$0xff]
    %v46 = vld [vmem:[#allocation5] sm:$0xff]
    %v47 = vld [vmem:[#allocation5 + $0x8] sm:$0xff]
    %v48 = vld [vmem:[#allocation5 + $0x10] sm:$0xff]
    %v49 = vld [vmem:[#allocation5 + $0x18] sm:$0xff]
    %v50 = vld [vmem:[%s2] sm:$0x1]
    %v52 = vperm.slane %v50, 0
    %vm54 = vcmask 261120
    %v56 = vsel %vm54, %v45, 0
    %58 = vmatpush.msra.mxu0 0.0
    %59 = vmatpush.msra.mxu0 0.0
    %60 = vmatpush.msra.mxu0 0.0
    %61 = vmatpush.msra.mxu0 0.0
    %62 = vmatpush.msra.mxu0 0.0
    %63 = vmatpush.msra.mxu0 0.0
    %64 = vmatpush.msra.mxu0 0.0
    %65 = vmatpush.msra.mxu0 0.0
    %66 = vmatpush.msra.mxu0 0.0
    %67 = vmatpush.msra.mxu0 0.0
    %68 = vmatpush.msra.mxu0 0.0
    %69 = vmatpush.msra.mxu0 0.0
    %70 = vmatpush.msra.mxu0 %v49
    %71 = vmatpush.msra.mxu0 %v48
    %72 = vmatpush.msra.mxu0 %v47
    %73 = vmatpush.msra.mxu0 %v46
    %74 = vmatmul.f32.gmra.mxu0 %v56
    %v75 = vpop.f32.mrf.mxu0
    %v76 = vadd.f32 %v52, %v75
    %77 = vdwg.mxu0
    %78 = vst [vmem:[#allocation7] sm:$0xff] %v76
    // Predicated region
    $region22: #{tpu_custom_call.1} parent=1 // pred_check
      _
    $region23: #{tpu_custom_call.1} parent=1 // pred_check_branch
      %80 = sbr.rel (0) target = $region25
    $region24: #{tpu_custom_call.1} parent=1 // pred_region
      %82 = vsyncadd [#allocation4], 0
      %s84 = sshll.u32 [#allocation7], 4
      %s85 = int_to_ptr.vmem [resolvable:$true] %s84
      %s86 = sshll.u32 %s3, 4
      %s87 = int_to_ptr.hbm [resolvable:$true] %s86
      %89 = dma.vmem_to_hbm [thread:$0]  %s85, 128, %s87, [#allocation4]
    $region25: #{tpu_custom_call.1} parent=1 // pred_fallthru
      _
    // Predicated region
    $region26: #{tpu_custom_call.1} parent=1 // pred_check
      _
    $region27: #{tpu_custom_call.1} parent=1 // pred_check_branch
      %91 = sbr.rel (0) target = $region29
    $region28: #{tpu_custom_call.1} parent=1 // pred_region
      %93 = dma.done [#allocation4], 128
    $region29: #{tpu_custom_call.1} parent=1 // pred_fallthru
      _
    %94 = vsyncpa [#allocation3], 1
    %95 = vsyncpa [#allocation6], 1
    %96 = vsyncpa [#allocation4], 1

</llo_original>
